<compile_context>
chip_gen: v5e
topology: v5e:2x2
jax: 0.10.0
libtpu: 0.0.40
codegen_flags: <defaults>
</compile_context>

<pallas_src>
import jax
import jax.numpy as jnp
from jax.experimental import pallas as pl
from jax.experimental.pallas import tpu as pltpu


# --------------------------------------------------------------------------- #
# Kernels
# --------------------------------------------------------------------------- #
def fpn_fused_kernel(xf_ref, skip_ref, w_ref, b_ref, up_ref, o_ref):
    # xf_ref:   (1, Cp, RH*W)   flat low-res pixels of this block (native dtype)
    # skip_ref: (1, Cs, PIX)    flat high-res skip pixels, PIX = R*OW
    # w_ref:    (Cp, Cs)        1x1 conv weight
    # b_ref:    (Cp, 1)         bias (f32)
    # up_ref:   (RH*W, PIX)     0/1 fused H+W nearest-upsample matrix (resident)
    # o_ref:    (1, Cp, PIX)
    conv = jnp.dot(w_ref[...], skip_ref[0], preferred_element_type=jnp.float32)
    up = jnp.dot(xf_ref[0], up_ref[...], preferred_element_type=jnp.float32)
    o_ref[0] = (conv + up + b_ref[...]).astype(o_ref.dtype)


def fpn_rows_kernel(x_ref, skip_ref, w_ref, b_ref, wup2_ref, o_ref):
    # x_ref:    (1, Cp, RH, W)
    # skip_ref: (1, Cs, PIX)    PIX = R*OW = RH * (2*OW)
    # wup2_ref: (W, 2*OW)       [wup | wup]: W-upsample with the H-duplication folded in
    # o_ref:    (1, Cp, PIX)
    RH = x_ref.shape[2]
    OW2 = wup2_ref.shape[1]

    conv = jnp.dot(w_ref[...], skip_ref[0], preferred_element_type=jnp.float32)
    conv = conv + b_ref[...]                                   # (Cp, PIX) f32
    wup2 = wup2_ref[...]

    # Static unroll; each row's result dies at its store (no concat, no big "up").
    for r in range(RH):
        row = jnp.dot(x_ref[0, :, r, :], wup2,
                      preferred_element_type=jnp.float32)      # (Cp, 2*OW)
        lo = r * OW2
        o_ref[0, :, lo:lo + OW2] = (conv[:, lo:lo + OW2] + row).astype(o_ref.dtype)


# --------------------------------------------------------------------------- #
# Planning: path selection, tile size and VMEM budget
# --------------------------------------------------------------------------- #
_MAX_RH_UNROLL = 16          # soft cap on the rows-path static unroll


def _pad(n, m):
    return -(-n // m) * m


def _plan(Cp, Cs, H, W, x_isz, skip_isz, out_isz):
    OH, OW = 2 * H, 2 * W
    try:
        phys = pltpu.get_tpu_info().vmem_capacity_bytes
    except Exception:
        phys = 64 << 20                                   # v7x-safe fallback
    vmem_limit = min((phys * 3) // 4, 100 << 20)          # ~48 MiB v7x, ~96 MiB v5e/v6e
    budget = vmem_limit - (2 << 20)                       # headroom for compiler scratch

    use_fused = W < 128

    def vmem_needed(R):
        RH = R // 2
        PIX = R * OW
        skip_b = 2 * _pad(Cs, 8) * _pad(PIX, 128) * skip_isz
        out_b = 2 * _pad(Cp, 8) * _pad(PIX, 128) * out_isz
        w_b = 2 * _pad(Cp, 8) * _pad(Cs, 128) * skip_isz
        bias_b = 2 * _pad(Cp, 8) * 128 * 4
        conv_tmp = _pad(Cp, 8) * _pad(PIX, 128) * 4
        if use_fused:
            x_b = 2 * _pad(Cp, 8) * _pad(RH * W, 128) * x_isz
            up_b = 2 * _pad(RH * W, 8) * _pad(PIX, 128) * x_isz
            tmp = 2 * conv_tmp                            # conv + up live at the add
        else:
            x_b = 2 * Cp * _pad(RH, 8) * _pad(W, 128) * x_isz
            up_b = 2 * _pad(W, 8) * _pad(2 * OW, 128) * x_isz
            tmp = conv_tmp + _pad(Cp, 8) * _pad(2 * OW, 128) * 4
        return skip_b + out_b + x_b + w_b + bias_b + up_b + tmp

    def legal(R):
        RH = R // 2
        if R != OH and (R * OW) % 128 != 0:               # skip/out flat block last dim
            return False
        if use_fused:
            if RH != H and (RH * W) % 128 != 0:           # flat x block last dim
                return False
        else:
            if RH != H and RH % 8 != 0:                   # x block second-last dim
                return False
            if RH > _MAX_RH_UNROLL:
                return False
        return True

    best_fit, smallest_legal = None, None
    for R in range(2, OH + 1, 2):
        if OH % R != 0 or not legal(R):
            continue
        if smallest_legal is None:
            smallest_legal = R
        if vmem_needed(R) <= budget:
            best_fit = R

    if best_fit is not None:
        R = best_fit
    else:
        # TODO(synk): add a cdiv grid + masked ragged tail instead of over-sizing here.
        R = smallest_legal if smallest_legal is not None else OH
        vmem_limit = min(phys, vmem_needed(R) + (2 << 20))

    return use_fused, R, int(vmem_limit)


# --------------------------------------------------------------------------- #
# Wrapper
# --------------------------------------------------------------------------- #
def fpn_block(x_nchw, skip_nchw, weight, bias, *, out_dtype=None):
    """Pallas FPNBlock forward.

    x_nchw:    (B, Cp, H, W)       pyramid features (any float dtype, read as-is)
    skip_nchw: (B, Cs, 2H, 2W)     skip features (any float dtype, read as-is)
    weight:    (Cp, Cs, 1, 1)      torch Conv2d weight layout
    bias:      (Cp,)
    out_dtype: output dtype (default promote(x, skip)); f32 accumulation in-kernel.
    returns:   (B, Cp, 2H, 2W)
    """
    B, Cp, H, W = x_nchw.shape
    Bs, Cs, OH, OW = skip_nchw.shape
    assert Bs == B and OH == 2 * H and OW == 2 * W, (x_nchw.shape, skip_nchw.shape)

    if out_dtype is None:
        out_dtype = jnp.promote_types(x_nchw.dtype, skip_nchw.dtype)
    x_dt = x_nchw.dtype
    skip_dt = skip_nchw.dtype

    # Free HBM views / tiny parameter reshapes only — no casts of the big streams.
    skip_flat = skip_nchw.reshape(B, Cs, OH * OW)
    w_mat = weight.reshape(Cp, Cs).astype(skip_dt)
    b_col = bias.reshape(Cp, 1).astype(jnp.float32)

    use_fused, R, vmem_limit = _plan(
        Cp, Cs, H, W,
        jnp.dtype(x_dt).itemsize, jnp.dtype(skip_dt).itemsize,
        jnp.dtype(out_dtype).itemsize)
    RH = R // 2
    PIX = R * OW
    grid = (B, OH // R)

    skip_spec = pl.BlockSpec((1, Cs, PIX), lambda b, r: (b, 0, r))
    w_spec = pl.BlockSpec((Cp, Cs), lambda b, r: (0, 0))
    b_spec = pl.BlockSpec((Cp, 1), lambda b, r: (0, 0))
    out_spec = pl.BlockSpec((1, Cp, PIX), lambda b, r: (b, 0, r))

    if use_fused:
        # Fused 0/1 nearest-upsample matrix: maps flat low-res pixel (i, w) of the
        # block to flat high-res pixel (orow, ocol) iff orow//2 == i and ocol//2 == w.
        irow = jnp.arange(RH * W) // W
        icol = jnp.arange(RH * W) % W
        orow = jnp.arange(PIX) // OW
        ocol = jnp.arange(PIX) % OW
        upmat = ((irow[:, None] == orow[None, :] // 2)
                 & (icol[:, None] == ocol[None, :] // 2)).astype(x_dt)

        kernel = fpn_fused_kernel
        x_in = x_nchw.reshape(B, Cp, H * W)                    # free view
        x_spec = pl.BlockSpec((1, Cp, RH * W), lambda b, r: (b, 0, r))
        up_spec = pl.BlockSpec((RH * W, PIX), lambda b, r: (0, 0))
        args = (x_in, skip_flat, w_mat, b_col, upmat)
    else:
        # W-direction upsample matrix with the H-duplication folded in: (W, 2*OW).
        wup = (jnp.arange(W)[:, None] == (jnp.arange(OW)[None, :] // 2)).astype(x_dt)
        wup2 = jnp.concatenate([wup, wup], axis=1)

        kernel = fpn_rows_kernel
        x_in = x_nchw
        x_spec = pl.BlockSpec((1, Cp, RH, W), lambda b, r: (b, 0, r, 0))
        up_spec = pl.BlockSpec((W, 2 * OW), lambda b, r: (0, 0))
        args = (x_in, skip_flat, w_mat, b_col, wup2)

    out_flat = pl.pallas_call(
        kernel,
        out_shape=jax.ShapeDtypeStruct((B, Cp, OH * OW), out_dtype),
        grid_spec=pltpu.PrefetchScalarGridSpec(
            num_scalar_prefetch=0,
            grid=grid,
            in_specs=[x_spec, skip_spec, w_spec, b_spec, up_spec],
            out_specs=out_spec,
        ),
        compiler_params=pltpu.CompilerParams(
            dimension_semantics=("parallel", "parallel"),
            vmem_limit_bytes=vmem_limit,
        ),
    )(*args)

    return out_flat.reshape(B, Cp, OH, OW)                     # free view back


# --------------------------------------------------------------------------- #
# Plain-JAX reference (matches the PyTorch forward)
# --------------------------------------------------------------------------- #
def fpn_block_ref(x_nchw, skip_nchw, weight, bias):
    up = jnp.repeat(jnp.repeat(x_nchw, 2, axis=2), 2, axis=3)  # nearest x2
    w = weight.reshape(weight.shape[0], weight.shape[1])
    conv = jnp.einsum('bchw,oc->bohw', skip_nchw, w) + bias[None, :, None, None]
    return up + conv


if __name__ == "__main__":
    key = jax.random.PRNGKey(0)
    kx, ks, kw, kb = jax.random.split(key, 4)

    # ---- small shape (fused small-W path) ----
    B, Cp, Cs, H, W = 2, 8, 4, 8, 8
    x = jax.random.normal(kx, (B, Cp, H, W), dtype=jnp.float32)
    skip = jax.random.normal(ks, (B, Cs, 2 * H, 2 * W), dtype=jnp.float32)
    weight = jax.random.normal(kw, (Cp, Cs, 1, 1), dtype=jnp.float32) * 0.1
    bias = jax.random.normal(kb, (Cp,), dtype=jnp.float32) * 0.1

    ref = fpn_block_ref(x, skip, weight, bias)
    out = jax.block_until_ready(fpn_block(x, skip, weight, bias))
    assert out.shape == (B, Cp, 2 * H, 2 * W), out.shape
    assert jnp.allclose(out, ref, rtol=1e-4, atol=1e-4), \
        float(jnp.max(jnp.abs(out - ref)))

    # bf16 inputs (true bandwidth path: no wrapper casts), f32 accumulate/output.
    out_bf16 = jax.block_until_ready(
        fpn_block(x.astype(jnp.bfloat16), skip.astype(jnp.bfloat16),
                  weight, bias, out_dtype=jnp.float32))
    assert out_bf16.shape == ref.shape
    assert jnp.allclose(out_bf16, ref, rtol=5e-2, atol=1e-1), \
        float(jnp.max(jnp.abs(out_bf16 - ref)))

    # ---- larger-W shape (rows path: per-row matmul + sliced store) ----
    B2, Cp2, Cs2, H2, W2 = 1, 8, 4, 128, 128
    x2 = jax.random.normal(kx, (B2, Cp2, H2, W2), dtype=jnp.float32)
    skip2 = jax.random.normal(ks, (B2, Cs2, 2 * H2, 2 * W2), dtype=jnp.float32)
    weight2 = jax.random.normal(kw, (Cp2, Cs2, 1, 1), dtype=jnp.float32) * 0.1
    bias2 = jax.random.normal(kb, (Cp2,), dtype=jnp.float32) * 0.1

    ref2 = fpn_block_ref(x2, skip2, weight2, bias2)
    out2 = jax.block_until_ready(fpn_block(x2, skip2, weight2, bias2))
    assert out2.shape == ref2.shape
    assert jnp.allclose(out2, ref2, rtol=1e-4, atol=1e-4), \
        float(jnp.max(jnp.abs(out2 - ref2)))

    print("KERNEL_OK")
</pallas_src>

<mosaic_0001>
module attributes {stable_mosaic.version = 11 : i64} {
  func.func @fpn_fused_kernel(%arg0: i32, %arg1: i32, %arg2: memref<1x8x64xf32, #tpu.memory_space<vmem>>, %arg3: memref<1x4x256xf32, #tpu.memory_space<vmem>>, %arg4: memref<8x4xf32, #tpu.memory_space<vmem>>, %arg5: memref<8x1xf32, #tpu.memory_space<vmem>>, %arg6: memref<64x256xf32, #tpu.memory_space<vmem>>, %arg7: memref<1x8x256xf32, #tpu.memory_space<vmem>>) attributes {dimension_semantics = [#tpu.dimension_semantics<parallel>, #tpu.dimension_semantics<parallel>], iteration_bounds = array<i64: 2, 1>, scalar_prefetch = 0 : i64, scratch_operands = 0 : i64, tpu.core_type = #tpu.core_type<tc>, window_params = [{transform_indices = @transform_0, window_bounds = array<i64: 1, 8, 64>}, {transform_indices = @transform_1, window_bounds = array<i64: 1, 4, 256>}, {pipeline_mode = #tpu.pipeline_mode<synchronous>, transform_indices = @transform_2, window_bounds = array<i64: 8, 4>}, {pipeline_mode = #tpu.pipeline_mode<synchronous>, transform_indices = @transform_3, window_bounds = array<i64: 8, 1>}, {pipeline_mode = #tpu.pipeline_mode<synchronous>, transform_indices = @transform_4, window_bounds = array<i64: 64, 256>}, {transform_indices = @transform_5, window_bounds = array<i64: 1, 8, 256>}]} {
    %c0 = arith.constant 0 : index
    %c0_0 = arith.constant 0 : index
    %0 = vector.load %arg4[%c0, %c0_0] : memref<8x4xf32, #tpu.memory_space<vmem>>, vector<8x4xf32>
    %c0_1 = arith.constant 0 : index
    %c0_2 = arith.constant 0 : index
    %c0_3 = arith.constant 0 : index
    %1 = vector.load %arg3[%c0_1, %c0_2, %c0_3] : memref<1x4x256xf32, #tpu.memory_space<vmem>>, vector<1x4x256xf32>
    %2 = vector.shape_cast %1 : vector<1x4x256xf32> to vector<4x256xf32>
    %cst = arith.constant dense<0.000000e+00> : vector<8x256xf32>
    %3 = tpu.matmul %0, %2, %cst {dimension_numbers = #tpu.dot_dimension_numbers<[1], [0], [0], [1], [0, 0, 1, 1], [], []>} : vector<8x4xf32>, vector<4x256xf32>, vector<8x256xf32> -> vector<8x256xf32>
    %c0_4 = arith.constant 0 : index
    %c0_5 = arith.constant 0 : index
    %c0_6 = arith.constant 0 : index
    %4 = vector.load %arg2[%c0_4, %c0_5, %c0_6] : memref<1x8x64xf32, #tpu.memory_space<vmem>>, vector<1x8x64xf32>
    %5 = vector.shape_cast %4 : vector<1x8x64xf32> to vector<8x64xf32>
    %c0_7 = arith.constant 0 : index
    %c0_8 = arith.constant 0 : index
    %6 = vector.load %arg6[%c0_7, %c0_8] : memref<64x256xf32, #tpu.memory_space<vmem>>, vector<64x256xf32>
    %cst_9 = arith.constant dense<0.000000e+00> : vector<8x256xf32>
    %7 = tpu.matmul %5, %6, %cst_9 {dimension_numbers = #tpu.dot_dimension_numbers<[1], [0], [0], [1], [0, 0, 1, 1], [], []>} : vector<8x64xf32>, vector<64x256xf32>, vector<8x256xf32> -> vector<8x256xf32>
    %8 = arith.addf %3, %7 : vector<8x256xf32>
    %c0_10 = arith.constant 0 : index
    %c0_11 = arith.constant 0 : index
    %9 = vector.load %arg5[%c0_10, %c0_11] : memref<8x1xf32, #tpu.memory_space<vmem>>, vector<8x1xf32>
    %10 = vector.broadcast %9 : vector<8x1xf32> to vector<8x256xf32>
    %11 = arith.addf %8, %10 : vector<8x256xf32>
    %c0_12 = arith.constant 0 : index
    %c0_13 = arith.constant 0 : index
    %c0_14 = arith.constant 0 : index
    %12 = vector.load %arg7[%c0_12, %c0_13, %c0_14] : memref<1x8x256xf32, #tpu.memory_space<vmem>>, vector<1x8x256xf32>
    %13 = vector.shape_cast %12 : vector<1x8x256xf32> to vector<8x256xf32>
    %14 = vector.shape_cast %11 : vector<8x256xf32> to vector<1x8x256xf32>
    tpu.vector_store %arg7[%c0_12, %c0_13, %c0_14], %14 {strides = array<i32>} : memref<1x8x256xf32, #tpu.memory_space<vmem>>, vector<1x8x256xf32>,
    return
  }
  func.func @transform_0(%arg0: i32, %arg1: i32) -> (i32, i32, i32) {
    %c0_i32 = arith.constant 0 : i32
    %c0_i32_0 = arith.constant 0 : i32
    return %arg0, %c0_i32, %arg1 : i32, i32, i32
  }
  func.func @transform_1(%arg0: i32, %arg1: i32) -> (i32, i32, i32) {
    %c0_i32 = arith.constant 0 : i32
    %c0_i32_0 = arith.constant 0 : i32
    return %arg0, %c0_i32, %arg1 : i32, i32, i32
  }
  func.func @transform_2(%arg0: i32, %arg1: i32) -> (i32, i32) {
    %c0_i32 = arith.constant 0 : i32
    %c0_i32_0 = arith.constant 0 : i32
    %c0_i32_1 = arith.constant 0 : i32
    return %c0_i32, %c0_i32_0 : i32, i32
  }
  func.func @transform_3(%arg0: i32, %arg1: i32) -> (i32, i32) {
    %c0_i32 = arith.constant 0 : i32
    %c0_i32_0 = arith.constant 0 : i32
    %c0_i32_1 = arith.constant 0 : i32
    return %c0_i32, %c0_i32_0 : i32, i32
  }
  func.func @transform_4(%arg0: i32, %arg1: i32) -> (i32, i32) {
    %c0_i32 = arith.constant 0 : i32
    %c0_i32_0 = arith.constant 0 : i32
    %c0_i32_1 = arith.constant 0 : i32
    return %c0_i32, %c0_i32_0 : i32, i32
  }
  func.func @transform_5(%arg0: i32, %arg1: i32) -> (i32, i32, i32) {
    %c0_i32 = arith.constant 0 : i32
    %c0_i32_0 = arith.constant 0 : i32
    return %arg0, %c0_i32, %arg1 : i32, i32, i32
  }
}

</mosaic_0001>

<llo_original>
// kernel: tpu_custom_call.1
$region0: #{tpu_custom_call.1}
  #allocation0 [shape = 'u32[]', space=smem, size = 0x4, offset = 0x4, fixed_abs, tag = 'smem constant byte address 0x4 - core index']
  #allocation1 [shape = 'u32[72,128]{1,0:T(1,128)}', space=vmem, size = 0x9000, scoped, tag = 'internal scratch']
  %s0 = inlined_call_operand.vmem [shape: f32[2,8,64], index: 0, kind: input, shape index: {}]
  %s1 = inlined_call_operand.hbm [shape: f32[2,4,256], index: 1, kind: input, shape index: {}]
  %s2 = inlined_call_operand.vmem [shape: f32[8,4], index: 2, kind: input, shape index: {}]
  %s3 = inlined_call_operand.vmem [shape: f32[8,1], index: 3, kind: input, shape index: {}]
  %s4 = inlined_call_operand.hbm [shape: f32[64,256], index: 4, kind: input, shape index: {}]
  %s5 = inlined_call_operand.hbm [shape: f32[2,8,256], index: 5, kind: output, shape index: {}]
  %s6 = sld [smem:[#allocation0]]
  $region61: #{tpu_custom_call.1} parent=0
    _
  %s8 = ssub.s32 1, %s6
  %s9 = scalar_select 0, %s8, %s6
  $region1: #{tpu_custom_call.1} parent=0
    #allocation2 [shape = 'u8[8192]{0}', space=vmem, size = 0x2000, scoped, tag = 'input window, operand 1']
    #allocation3 [shape = 's32[2]{0}', space=sflag, size = 0x8, scoped, tag = 'scoped memory for tpu_custom_call.1']
    #allocation4 [shape = 's32[2]{0}', space=sflag, size = 0x8, scoped, tag = 'scoped memory for tpu_custom_call.1']
    #allocation5 [shape = 'u8[65536]{0}', space=vmem, size = 0x10000, scoped, tag = 'input window, operand 4, single buffered']
    #allocation6 [shape = 's32[1]{0}', space=sflag, size = 0x4, scoped, tag = 'scoped memory for tpu_custom_call.1']
    #allocation7 [shape = 'u8[16384]{0}', space=vmem, size = 0x4000, scoped, tag = 'output window, operand 0']
    %10 = vsyncpa [#allocation3], 0
    %s11 = scalar_lea.sflag [#allocation3], 1
    %12 = vsyncpa %s11, 0
    %13 = vsyncpa [#allocation6], 0
    %14 = vsyncpa [#allocation4], 0
    %s15 = scalar_lea.sflag [#allocation4], 1
    %16 = vsyncpa %s15, 0
    loop: start=0, step=1, limit=4
    $region2: #{tpu_custom_call.1} parent=1 // loop_pre_header
      _
    $region3: #{tpu_custom_call.1} parent=1 // loop_header
      %s18 = sphi 0, %s22
      %p19 = scmp.ge.s32.totalorder %s18, 4
      %s25 = sphi 0, %s37
      %s26 = sphi 0, %s33
      %s27 = sphi 0, %s25
      %s28 = sphi 0, %s26
      %s29 = sphi 0, %s27
      %s30 = sphi 0, %s28
      %s42 = sphi 0, %s44
      %s45 = sphi 0, %s42
      %s46 = sphi 0, %s45
      %s62 = sphi 0, %s46
      %s70 = sphi 0, %s72
      %s73 = sphi 0, %s70
      %s74 = sphi 0, %s73
      %s90 = sphi 0, %s74
      %s94 = sphi 0, %s94
      %s96 = sphi 0, %s94
      %s97 = sphi 0, %s96
      %s111 = sphi 0, %s97
      %s115 = sphi 0, %s115
      %s117 = sphi 0, %s115
      %s118 = sphi 0, %s117
      %s132 = sphi 0, %s118
      %s136 = sphi 0, %s136
      %s138 = sphi 0, %s136
      %s139 = sphi 0, %s138
      %s153 = sphi 0, %s139
      %s161 = sphi 0, %s163
      %s164 = sphi 0, %s161
      %s165 = sphi 0, %s164
      %s181 = sphi 0, %s165
    $region4: #{tpu_custom_call.1} parent=1 // loop_header_branch
      %21 = sbr.rel (%p19) target = $region8
    $region5: #{tpu_custom_call.1} parent=1 // loop_body
      %s23 = ssub.s32 %s18, 1
      %s24 = ssub.s32 %s18, 2
      %s31 = sadd.s32 1, %s26
      %p32 = scmp.ge.s32.totalorder %s31, 1
      %s33 = scalar_select %p32, 0, %s31
      %s34 = sadd.s32 1, %s25
      %s35 = scalar_select %p32, %s34, %s25
      %p36 = scmp.ge.s32.totalorder %s35, 2
      %s37 = scalar_select %p36, 0, %s35
      %s38 = ssub.s32 %s25, %s37
      %s39 = ssub.s32 %s26, %s33
      %s40 = sor.u32 %s38, %s39
      %p41 = scmp.eq.s32.totalorder %s40, 0
      %s43 = sadd.s32 %s42, 1
      %s44 = scalar_select %p41, %s42, %s43
      %p47 = pneg %p41
      %p48 = scmp.eq.s32.totalorder %s18, 1
      %p49 = por %p47, %p48
      %p50 = scmp.ne.s32.totalorder %s42, %s45
      %p51 = scmp.eq.s32.totalorder %s18, 0
      %p52 = por %p50, %p51
      %p53 = scmp.ne.s32.totalorder %s42, %s45
      %p54 = scmp.eq.s32.totalorder %s23, 1
      %p55 = por %p53, %p54
      %p56 = scmp.ne.s32.totalorder %s45, %s46
      %p57 = scmp.eq.s32.totalorder %s23, 0
      %p58 = por %p56, %p57
      %p59 = scmp.ne.s32.totalorder %s45, %s46
      %p60 = scmp.eq.s32.totalorder %s24, 1
      %p61 = por %p59, %p60
      %p63 = scmp.ne.s32.totalorder %s46, %s62
      %p64 = scmp.eq.s32.totalorder %s24, 0
      %p65 = por %p63, %p64
      %s66 = ssub.s32 %s25, %s37
      %s67 = ssub.s32 %s26, %s33
      %s68 = sor.u32 %s66, %s67
      %p69 = scmp.eq.s32.totalorder %s68, 0
      %s71 = sadd.s32 %s70, 1
      %s72 = scalar_select %p69, %s70, %s71
      %p75 = pneg %p69
      %p76 = scmp.eq.s32.totalorder %s18, 1
      %p77 = por %p75, %p76
      %p78 = scmp.ne.s32.totalorder %s70, %s73
      %p79 = scmp.eq.s32.totalorder %s18, 0
      %p80 = por %p78, %p79
      %p81 = scmp.ne.s32.totalorder %s70, %s73
      %p82 = scmp.eq.s32.totalorder %s23, 1
      %p83 = por %p81, %p82
      %p84 = scmp.ne.s32.totalorder %s73, %s74
      %p85 = scmp.eq.s32.totalorder %s23, 0
      %p86 = por %p84, %p85
      %p87 = scmp.ne.s32.totalorder %s73, %s74
      %p88 = scmp.eq.s32.totalorder %s24, 1
      %p89 = por %p87, %p88
      %p91 = scmp.ne.s32.totalorder %s74, %s90
      %p92 = scmp.eq.s32.totalorder %s24, 0
      %p93 = por %p91, %p92
      %s95 = sadd.s32 %s94, 1
      %p98 = scmp.eq.s32.totalorder %s18, 1
      %p99 = scmp.ne.s32.totalorder %s94, %s96
      %p100 = scmp.eq.s32.totalorder %s18, 0
      %p101 = por %p99, %p100
      %p102 = scmp.ne.s32.totalorder %s94, %s96
      %p103 = scmp.eq.s32.totalorder %s23, 1
      %p104 = por %p102, %p103
      %p105 = scmp.ne.s32.totalorder %s96, %s97
      %p106 = scmp.eq.s32.totalorder %s23, 0
      %p107 = por %p105, %p106
      %p108 = scmp.ne.s32.totalorder %s96, %s97
      %p109 = scmp.eq.s32.totalorder %s24, 1
      %p110 = por %p108, %p109
      %p112 = scmp.ne.s32.totalorder %s97, %s111
      %p113 = scmp.eq.s32.totalorder %s24, 0
      %p114 = por %p112, %p113
      %s116 = sadd.s32 %s115, 1
      %p119 = scmp.eq.s32.totalorder %s18, 1
      %p120 = scmp.ne.s32.totalorder %s115, %s117
      %p121 = scmp.eq.s32.totalorder %s18, 0
      %p122 = por %p120, %p121
      %p123 = scmp.ne.s32.totalorder %s115, %s117
      %p124 = scmp.eq.s32.totalorder %s23, 1
      %p125 = por %p123, %p124
      %p126 = scmp.ne.s32.totalorder %s117, %s118
      %p127 = scmp.eq.s32.totalorder %s23, 0
      %p128 = por %p126, %p127
      %p129 = scmp.ne.s32.totalorder %s117, %s118
      %p130 = scmp.eq.s32.totalorder %s24, 1
      %p131 = por %p129, %p130
      %p133 = scmp.ne.s32.totalorder %s118, %s132
      %p134 = scmp.eq.s32.totalorder %s24, 0
      %p135 = por %p133, %p134
      %s137 = sadd.s32 %s136, 1
      %p140 = scmp.eq.s32.totalorder %s18, 1
      %p141 = scmp.ne.s32.totalorder %s136, %s138
      %p142 = scmp.eq.s32.totalorder %s18, 0
      %p143 = por %p141, %p142
      %p144 = scmp.ne.s32.totalorder %s136, %s138
      %p145 = scmp.eq.s32.totalorder %s23, 1
      %p146 = por %p144, %p145
      %p147 = scmp.ne.s32.totalorder %s138, %s139
      %p148 = scmp.eq.s32.totalorder %s23, 0
      %p149 = por %p147, %p148
      %p150 = scmp.ne.s32.totalorder %s138, %s139
      %p151 = scmp.eq.s32.totalorder %s24, 1
      %p152 = por %p150, %p151
      %p154 = scmp.ne.s32.totalorder %s139, %s153
      %p155 = scmp.eq.s32.totalorder %s24, 0
      %p156 = por %p154, %p155
      %s157 = ssub.s32 %s25, %s37
      %s158 = ssub.s32 %s26, %s33
      %s159 = sor.u32 %s157, %s158
      %p160 = scmp.eq.s32.totalorder %s159, 0
      %s162 = sadd.s32 %s161, 1
      %s163 = scalar_select %p160, %s161, %s162
      %p166 = pneg %p160
      %p167 = scmp.eq.s32.totalorder %s18, 1
      %p168 = por %p166, %p167
      %p169 = scmp.ne.s32.totalorder %s161, %s164
      %p170 = scmp.eq.s32.totalorder %s18, 0
      %p171 = por %p169, %p170
      %p172 = scmp.ne.s32.totalorder %s161, %s164
      %p173 = scmp.eq.s32.totalorder %s23, 1
      %p174 = por %p172, %p173
      %p175 = scmp.ne.s32.totalorder %s164, %s165
      %p176 = scmp.eq.s32.totalorder %s23, 0
      %p177 = por %p175, %p176
      %p178 = scmp.ne.s32.totalorder %s164, %s165
      %p179 = scmp.eq.s32.totalorder %s24, 1
      %p180 = por %p178, %p179
      %p182 = scmp.ne.s32.totalorder %s165, %s181
      %p183 = scmp.eq.s32.totalorder %s24, 0
      %p184 = por %p182, %p183
      %p185 = scmp.le.s32.totalorder 1, %s18
      %p186 = scmp.lt.s32.totalorder %s18, 3
      %p187 = pnand %p185, %p186
      %p188 = pneg %p187
      // Predicated region
      $region9: #{tpu_custom_call.1} parent=5 // pred_check
        _
      $region10: #{tpu_custom_call.1} parent=5 // pred_check_branch
        %190 = sbr.rel (%p187) target = $region12
      $region11: #{tpu_custom_call.1} parent=5 // pred_region
        %s191 = ssub.s32 %s18, 1
        // Predicated region
        $region13: #{tpu_custom_call.1} parent=11 // pred_check
          %p192 = pneg %p107
        $region14: #{tpu_custom_call.1} parent=11 // pred_check_branch
          %194 = sbr.rel (%p192) target = $region16
        $region15: #{tpu_custom_call.1} parent=11 // pred_region
          _
        $region16: #{tpu_custom_call.1} parent=11 // pred_fallthru
          _
        // Predicated region
        $region17: #{tpu_custom_call.1} parent=11 // pred_check
          %p195 = pneg %p128
        $region18: #{tpu_custom_call.1} parent=11 // pred_check_branch
          %197 = sbr.rel (%p195) target = $region20
        $region19: #{tpu_custom_call.1} parent=11 // pred_region
          _
        $region20: #{tpu_custom_call.1} parent=11 // pred_fallthru
          _
        // Predicated region
        $region21: #{tpu_custom_call.1} parent=11 // pred_check
          %p198 = pneg %p149
        $region22: #{tpu_custom_call.1} parent=11 // pred_check_branch
          %200 = sbr.rel (%p198) target = $region24
        $region23: #{tpu_custom_call.1} parent=11 // pred_region
          %202 = vsyncadd [#allocation6], 0
          %s203 = sshll.u32 %s4, 4
          %s204 = int_to_ptr.hbm [resolvable:$true] %s203
          %s205 = sshll.u32 [#allocation5], 4
          %s206 = int_to_ptr.vmem [resolvable:$true] %s205
          %211 = dma.hbm_to_vmem [thread:$0]  %s204, 2048, %s206, [#allocation6], 256, 256, 16
        $region24: #{tpu_custom_call.1} parent=11 // pred_fallthru
          _
      $region12: #{tpu_custom_call.1} parent=5 // pred_fallthru
        _
      %p212 = scmp.lt.s32.totalorder %s18, 2
      // Predicated region
      $region25: #{tpu_custom_call.1} parent=5 // pred_check
        %p213 = pneg %p212
      $region26: #{tpu_custom_call.1} parent=5 // pred_check_branch
        %215 = sbr.rel (%p213) target = $region28
      $region27: #{tpu_custom_call.1} parent=5 // pred_region
        // Predicated region
        $region29: #{tpu_custom_call.1} parent=27 // pred_check
          %p216 = pneg %p52
        $region30: #{tpu_custom_call.1} parent=27 // pred_check_branch
          %218 = sbr.rel (%p216) target = $region32
        $region31: #{tpu_custom_call.1} parent=27 // pred_region
          %p219 = scmp.lt.s32.totalorder %s25, 1
          %s220 = scalar_select %p219, %s25, 1
          %p221 = scmp.lt.s32.totalorder %s26, 0
          %s222 = scalar_select %p221, %s26, 0
          %s223 = sadd.s32 %s222, %s220
          %s224 = smul.addr %s223, 8
          %s225 = scalar_lea.vmem %s0, %s224
        $region32: #{tpu_custom_call.1} parent=27 // pred_fallthru
          _
        // Predicated region
        $region33: #{tpu_custom_call.1} parent=27 // pred_check
          %p226 = pneg %p80
        $region34: #{tpu_custom_call.1} parent=27 // pred_check_branch
          %228 = sbr.rel (%p226) target = $region36
        $region35: #{tpu_custom_call.1} parent=27 // pred_region
          %s229 = sand.u32 %s70, 1
          %s230 = scalar_lea.sflag [#allocation3], %s229
          %s231 = sand.u32 %s70, 1
          %s232 = smul.addr %s231, 8
          %s233 = scalar_lea.vmem [#allocation2], %s232
          %s234 = smul.u32 2, %s26
          %236 = vsyncadd %s230, 0
          %s237 = smul.addr %s25, 2
          %s238 = sadd.s32 %s234, %s237
          %s239 = smul.addr %s238, 4
          %s240 = scalar_lea.hbm %s1, %s239
          %s242 = sshll.u32 %s240, 4
          %s243 = int_to_ptr.hbm [resolvable:$true] %s242
          %s244 = sshll.u32 %s233, 4
          %s245 = int_to_ptr.vmem [resolvable:$true] %s244
          %247 = dma.hbm_to_vmem [thread:$0]  %s243, 128, %s245, %s230
        $region36: #{tpu_custom_call.1} parent=27 // pred_fallthru
          _
      $region28: #{tpu_custom_call.1} parent=5 // pred_fallthru
        _
      %p248 = scmp.le.s32.totalorder 1, %s18
      %p249 = scmp.lt.s32.totalorder %s18, 3
      %p250 = pnand %p248, %p249
      %p251 = pneg %p250
      // Predicated region
      $region37: #{tpu_custom_call.1} parent=5 // pred_check
        _
      $region38: #{tpu_custom_call.1} parent=5 // pred_check_branch
        %253 = sbr.rel (%p250) target = $region40
      $region39: #{tpu_custom_call.1} parent=5 // pred_region
        %s254 = ssub.s32 %s18, 1
        %s255 = sand.u32 %s73, 1
        %s256 = scalar_lea.sflag [#allocation3], %s255
        %s257 = sand.u32 %s73, 1
        %s258 = smul.addr %s257, 8
        %s259 = scalar_lea.vmem [#allocation2], %s258
        // Predicated region
        $region41: #{tpu_custom_call.1} parent=39 // pred_check
          %p260 = pneg %p86
        $region42: #{tpu_custom_call.1} parent=39 // pred_check_branch
          %262 = sbr.rel (%p260) target = $region44
        $region43: #{tpu_custom_call.1} parent=39 // pred_region
          %264 = dma.done %s256, 128
        $region44: #{tpu_custom_call.1} parent=39 // pred_fallthru
          _
        // Predicated region
        $region45: #{tpu_custom_call.1} parent=39 // pred_check
          %p265 = pneg %p149
        $region46: #{tpu_custom_call.1} parent=39 // pred_check_branch
          %267 = sbr.rel (%p265) target = $region48
        $region47: #{tpu_custom_call.1} parent=39 // pred_region
          %269 = dma.done [#allocation6], 2048
        $region48: #{tpu_custom_call.1} parent=39 // pred_fallthru
          _
        %p270 = scmp.lt.s32.totalorder %s27, 1
        %s271 = scalar_select %p270, %s27, 1
        %p272 = scmp.lt.s32.totalorder %s28, 0
        %s273 = scalar_select %p272, %s28, 0
        %s274 = sadd.s32 %s273, %s271
        %s275 = smul.addr %s274, 8
        %s276 = scalar_lea.vmem %s0, %s275
        %p277 = pneg %p58
        %p278 = pneg %p55
        %s279 = sand.u32 %s73, 1
        %s280 = scalar_lea.sflag [#allocation3], %s279
        %s281 = sand.u32 %s73, 1
        %s282 = smul.addr %s281, 8
        %s283 = scalar_lea.vmem [#allocation2], %s282
        %p284 = pneg %p86
        %p285 = pneg %p83
        %p286 = pneg %p107
        %p287 = pneg %p104
        %p288 = pneg %p128
        %p289 = pneg %p125
        %p290 = pneg %p149
        %p291 = pneg %p146
        %p292 = pneg %p177
        %p293 = pneg %p174
        %s294 = sand.u32 %s164, 1
        %s295 = scalar_lea.sflag [#allocation4], %s294
        %s296 = sand.u32 %s164, 1
        %s297 = smul.addr %s296, 16
        %s298 = scalar_lea.vmem [#allocation7], %s297
        %p299 = scmp.lt.s32.totalorder %s27, 1
        %s300 = scalar_select %p299, %s27, 1
        %p301 = scmp.lt.s32.totalorder %s28, 0
        %s302 = scalar_select %p301, %s28, 0
        %s303 = sadd.s32 %s302, %s300
        %s304 = smul.addr %s303, 8
        %s305 = scalar_lea.vmem %s0, %s304
        %s306 = smul.u32 2, %s28
        %s307 = smul.u32 2, %s28
        %v308 = vld [vmem:[%s2] sm:$0xff]
        %v309 = vld [vmem:[%s259] sm:$0xff]
        %v310 = vld [vmem:[%s305] sm:$0xff]
        %v311 = vld [vmem:[#allocation5] sm:$0xff]
        %v312 = vld [vmem:[#allocation5 + $0x8] sm:$0xff]
        %v313 = vld [vmem:[#allocation5 + $0x10] sm:$0xff]
        %v314 = vld [vmem:[#allocation5 + $0x18] sm:$0xff]
        %v315 = vld [vmem:[#allocation5 + $0x20] sm:$0xff]
        %v316 = vld [vmem:[#allocation5 + $0x28] sm:$0xff]
        %v317 = vld [vmem:[#allocation5 + $0x30] sm:$0xff]
        %v318 = vld [vmem:[#allocation5 + $0x38] sm:$0xff]
        %v319 = vld [vmem:[#allocation5 + $0x40] sm:$0xff]
        %v320 = vld [vmem:[#allocation5 + $0x48] sm:$0xff]
        %v321 = vld [vmem:[#allocation5 + $0x50] sm:$0xff]
        %v322 = vld [vmem:[#allocation5 + $0x58] sm:$0xff]
        %v323 = vld [vmem:[#allocation5 + $0x60] sm:$0xff]
        %v324 = vld [vmem:[#allocation5 + $0x68] sm:$0xff]
        %v325 = vld [vmem:[#allocation5 + $0x70] sm:$0xff]
        %v326 = vld [vmem:[#allocation5 + $0x78] sm:$0xff]
        %vm327 = vcmask 523264
        %v329 = vsel %vm327, %v310, 0
        %331 = vmatpush.msra.mxu0 0.0
        %332 = vmatpush.msra.mxu0 0.0
        %333 = vmatpush.msra.mxu0 0.0
        %334 = vmatpush.msra.mxu0 0.0
        %335 = vmatpush.msra.mxu0 0.0
        %336 = vmatpush.msra.mxu0 0.0
        %337 = vmatpush.msra.mxu0 0.0
        %338 = vmatpush.msra.mxu0 0.0
        %339 = vmatpush.msra.mxu0 %v325
        %340 = vmatpush.msra.mxu0 %v323
        %341 = vmatpush.msra.mxu0 %v321
        %342 = vmatpush.msra.mxu0 %v319
        %343 = vmatpush.msra.mxu0 %v317
        %344 = vmatpush.msra.mxu0 %v315
        %345 = vmatpush.msra.mxu0 %v313
        %346 = vmatpush.msra.mxu0 %v311
        %347 = vmatmul.f32.gmra.mxu0 %v329
        %v348 = vpop.f32.mrf.mxu0
        %v349 = vadd.f32 0.0, %v348
        %350 = vdwg.mxu0
        %351 = vmatpush.msra.mxu0 0.0
        %352 = vmatpush.msra.mxu0 0.0
        %353 = vmatpush.msra.mxu0 0.0
        %354 = vmatpush.msra.mxu0 0.0
        %355 = vmatpush.msra.mxu0 0.0
        %356 = vmatpush.msra.mxu0 0.0
        %357 = vmatpush.msra.mxu0 0.0
        %358 = vmatpush.msra.mxu0 0.0
        %359 = vmatpush.msra.mxu0 %v326
        %360 = vmatpush.msra.mxu0 %v324
        %361 = vmatpush.msra.mxu0 %v322
        %362 = vmatpush.msra.mxu0 %v320
        %363 = vmatpush.msra.mxu0 %v318
        %364 = vmatpush.msra.mxu0 %v316
        %365 = vmatpush.msra.mxu0 %v314
        %366 = vmatpush.msra.mxu0 %v312
        %367 = vmatmul.f32.gmra.mxu0 %v329
        %v368 = vpop.f32.mrf.mxu0
        %v369 = vadd.f32 0.0, %v368
        %370 = vdwg.mxu0
        %372 = vst [vmem:[#allocation1] ss:$2 sm:$0xff] %v309
        %v373 = vld.sshfl [vmem:[#allocation1] sm:$0xff pattern:$0x75316420]
        %v374 = vld.sshfl [vmem:[#allocation1 + $0x8] sm:$0xff pattern:$0x75316420]
        %vm375 = vcmask 31744
        %v377 = vsel %vm375, %v308, 0
        %vm379 = vcmask 1043456
        %v380 = vsel %vm379, %v373, 0
        %v382 = vsel %vm379, %v374, 0
        %384 = vmatpush.msra.mxu0 0.0
        %385 = vmatpush.msra.mxu0 0.0
        %386 = vmatpush.msra.mxu0 0.0
        %387 = vmatpush.msra.mxu0 0.0
        %388 = vmatpush.msra.mxu0 0.0
        %389 = vmatpush.msra.mxu0 0.0
        %390 = vmatpush.msra.mxu0 0.0
        %391 = vmatpush.msra.mxu0 0.0
        %392 = vmatpush.msra.mxu0 0.0
        %393 = vmatpush.msra.mxu0 0.0
        %394 = vmatpush.msra.mxu0 0.0
        %395 = vmatpush.msra.mxu0 0.0
        %396 = vmatpush.msra.mxu0 0.0
        %397 = vmatpush.msra.mxu0 0.0
        %398 = vmatpush.msra.mxu0 0.0
        %399 = vmatpush.msra.mxu0 %v380
        %400 = vmatmul.f32.gmra.mxu0 %v377
        %v401 = vpop.f32.mrf.mxu0
        %v402 = vadd.f32 %v349, %v401
        %403 = vdwg.mxu0
        %404 = vmatpush.msra.mxu0 0.0
        %405 = vmatpush.msra.mxu0 0.0
        %406 = vmatpush.msra.mxu0 0.0
        %407 = vmatpush.msra.mxu0 0.0
        %408 = vmatpush.msra.mxu0 0.0
        %409 = vmatpush.msra.mxu0 0.0
        %410 = vmatpush.msra.mxu0 0.0
        %411 = vmatpush.msra.mxu0 0.0
        %412 = vmatpush.msra.mxu0 0.0
        %413 = vmatpush.msra.mxu0 0.0
        %414 = vmatpush.msra.mxu0 0.0
        %415 = vmatpush.msra.mxu0 0.0
        %416 = vmatpush.msra.mxu0 0.0
        %417 = vmatpush.msra.mxu0 0.0
        %418 = vmatpush.msra.mxu0 0.0
        %419 = vmatpush.msra.mxu0 %v382
        %420 = vmatmul.f32.gmra.mxu0 %v377
        %v421 = vpop.f32.mrf.mxu0
        %v422 = vadd.f32 %v369, %v421
        %423 = vdwg.mxu0
        %v424 = vld [vmem:[%s3] sm:$0xff]
        %426 = vset.pattern.permute.xlu0 0
        %427 = vperm.xlu0 %426, %v424
        %v428 = vpop.permute.xlu0 %427
        %v430 = vadd.f32 %v402, %v428
        %v431 = vadd.f32 %v422, %v428
        %432 = vst [vmem:[%s298] sm:$0xff] %v430
        %433 = vst [vmem:[%s298 + $0x8] sm:$0xff] %v431
        %s434 = sand.u32 %s164, 1
        %s435 = scalar_lea.sflag [#allocation4], %s434
        %s436 = sand.u32 %s164, 1
        %s437 = smul.addr %s436, 16
        %s438 = scalar_lea.vmem [#allocation7], %s437
        // Predicated region
        $region49: #{tpu_custom_call.1} parent=39 // pred_check
          %p439 = pneg %p174
        $region50: #{tpu_custom_call.1} parent=39 // pred_check_branch
          %441 = sbr.rel (%p439) target = $region52
        $region51: #{tpu_custom_call.1} parent=39 // pred_region
          %s442 = smul.u32 2, %s28
          %444 = vsyncadd %s435, 0
          %s445 = smul.addr %s27, 2
          %s446 = sadd.s32 %s442, %s445
          %s447 = smul.addr %s446, 8
          %s448 = scalar_lea.hbm %s5, %s447
          %s450 = sshll.u32 %s438, 4
          %s451 = int_to_ptr.vmem [resolvable:$true] %s450
          %s452 = sshll.u32 %s448, 4
          %s453 = int_to_ptr.hbm [resolvable:$true] %s452
          %455 = dma.vmem_to_hbm [thread:$0]  %s451, 256, %s453, %s435
        $region52: #{tpu_custom_call.1} parent=39 // pred_fallthru
          _
      $region40: #{tpu_custom_call.1} parent=5 // pred_fallthru
        _
      %p456 = scmp.le.s32.totalorder 2, %s18
      // Predicated region
      $region53: #{tpu_custom_call.1} parent=5 // pred_check
        %p457 = pneg %p456
      $region54: #{tpu_custom_call.1} parent=5 // pred_check_branch
        %459 = sbr.rel (%p457) target = $region56
      $region55: #{tpu_custom_call.1} parent=5 // pred_region
        %s460 = ssub.s32 %s18, 2
        // Predicated region
        $region57: #{tpu_custom_call.1} parent=55 // pred_check
          %p461 = pneg %p180
        $region58: #{tpu_custom_call.1} parent=55 // pred_check_branch
          %463 = sbr.rel (%p461) target = $region60
        $region59: #{tpu_custom_call.1} parent=55 // pred_region
          %s464 = sand.u32 %s165, 1
          %s465 = scalar_lea.sflag [#allocation4], %s464
          %s466 = sand.u32 %s165, 1
          %s467 = smul.addr %s466, 16
          %s468 = scalar_lea.vmem [#allocation7], %s467
          %470 = dma.done %s465, 256
        $region60: #{tpu_custom_call.1} parent=55 // pred_fallthru
          _
      $region56: #{tpu_custom_call.1} parent=5 // pred_fallthru
        _
    $region6: #{tpu_custom_call.1} parent=1 // loop_footer
      %s22 = sadd.s32 1, %s18
    $region7: #{tpu_custom_call.1} parent=1 // loop_footer_branch
      %17 = sbr.rel target = $region3
    $region8: #{tpu_custom_call.1} parent=1 // loop_exit
      _
    %471 = vsyncpa [#allocation3], 1
    %s472 = scalar_lea.sflag [#allocation3], 1
    %473 = vsyncpa %s472, 1
    %474 = vsyncpa [#allocation6], 1
    %475 = vsyncpa [#allocation4], 1
    %s476 = scalar_lea.sflag [#allocation4], 1
    %477 = vsyncpa %s476, 1

</llo_original>
